<compile_context>
chip_gen: v7x
topology: tpu7x:2x2x1
jax: 0.10.0
libtpu: 0.0.40
codegen_flags: <defaults>
</compile_context>

<pallas_src>
import functools

import jax
import jax.numpy as jnp
from jax.experimental import pallas as pl
from jax.experimental.pallas import tpu as pltpu

LANE = 128  # TPU lane width; feature axes are zero-padded to a multiple of this.
            # (On v6e/v7x, real hidden widths >= 256 keep the 2x256x256 MXU full;
            #  128 already saturates v5e's 4x128x128 MXU.)


def _round_up(x, m):
    return ((x + m - 1) // m) * m


def _full_spec(shape):
    # Whole-array block, single (empty) grid.
    return pl.BlockSpec(shape, lambda: (0,) * len(shape))


def _vmem_limit_bytes():
    """~75% of this generation's physical VMEM (v7x: 64 MiB, v5e/v6e: 128 MiB)."""
    cap = 64 * 1024 * 1024
    try:
        cap = int(getattr(pltpu.get_tpu_info(), "vmem_capacity_bytes", cap))
    except Exception:
        pass
    return max(cap * 3 // 4, 32 * 1024 * 1024)


# ----------------------------- fused Pallas kernel ---------------------------

def fused_gnn_kernel(a_ref, x_ref, w0_ref, wr_ref, b_ref, wl_ref, bl_ref, o_ref,
                     *, n_layers):
    """Whole GNN forward in one kernel.

    a_ref : [N, N]               bf16  normalized adjacency (VMEM-resident)
    x_ref : [N, Din]             bf16  padded node features
    w0_ref: [Din, Dh]            bf16  layer-0 GCN weight (its own padded width)
    wr_ref: [max(L-1,1), Dh, Dh] bf16  stacked GCN weights, layers 1..L-1
    b_ref : [L, 1, Dh]           f32   stacked GCN biases
    wl_ref: [Dh, Do]             bf16  padded final Linear weight
    bl_ref: [1, Do]              f32   padded final Linear bias
    o_ref : [N, Do]              f32   padded output (real result in column 0)
    """
    h = x_ref[...]                                    # bf16 carry between layers
    for l in range(n_layers):                         # compile-time static unroll
        w = w0_ref[...] if l == 0 else wr_ref[l - 1]
        xw = jnp.dot(h, w, preferred_element_type=jnp.float32)        # feature transform
        agg = jnp.dot(a_ref[...], xw.astype(jnp.bfloat16),            # aggregation;
                      preferred_element_type=jnp.float32)             # a_ref read per layer
        h = jnp.maximum(agg + b_ref[l], 0.0).astype(jnp.bfloat16)     # bias + ReLU (f32 VPU)
    out = jnp.dot(h, wl_ref[...], preferred_element_type=jnp.float32)  # final Linear
    o_ref[...] = out + bl_ref[...]


# ------------------------- init-time padding (hoisted) ------------------------

def pad_gnn_params(params):
    """Zero-pad & stack parameters ONCE, outside the per-call path."""
    n_layers = len(params["gcn"])
    in_dim, hidden = params["gcn"][0][0].shape
    wl, bl = params["lin"]
    out_dim = wl.shape[1]

    d_in = _round_up(in_dim, LANE)
    d_h = _round_up(hidden, LANE)
    d_out = _round_up(out_dim, LANE)   # lane-dense output (no masked vst.msk)

    w0, b0 = params["gcn"][0]
    w0_p = jnp.zeros((d_in, d_h), jnp.bfloat16).at[:in_dim, :hidden].set(
        w0.astype(jnp.bfloat16))

    wr_p = jnp.zeros((max(n_layers - 1, 1), d_h, d_h), jnp.bfloat16)
    b_p = jnp.zeros((n_layers, 1, d_h), jnp.float32).at[0, :, :hidden].set(b0)
    for l in range(1, n_layers):
        w, b = params["gcn"][l]
        wr_p = wr_p.at[l - 1, :hidden, :hidden].set(w.astype(jnp.bfloat16))
        b_p = b_p.at[l, :, :hidden].set(b)

    wl_p = jnp.zeros((d_h, d_out), jnp.bfloat16).at[:hidden, :out_dim].set(
        wl.astype(jnp.bfloat16))
    bl_p = jnp.zeros((1, d_out), jnp.float32).at[:, :out_dim].set(bl)

    return {"w0": w0_p, "wr": wr_p, "b": b_p, "wl": wl_p, "bl": bl_p,
            "dims": (in_dim, hidden, out_dim, n_layers)}


def make_gnn_forward(padded):
    """Build a jitted forward(x, a_hat) around a single fused pallas_call."""
    in_dim, hidden, out_dim, n_layers = padded["dims"]
    w0_p, wr_p, b_p, wl_p, bl_p = (padded[k] for k in ("w0", "wr", "b", "wl", "bl"))
    d_in, d_h = w0_p.shape
    d_out = wl_p.shape[1]

    kernel = functools.partial(fused_gnn_kernel, n_layers=n_layers)
    vmem_limit = _vmem_limit_bytes()

    @jax.jit
    def forward(x, a_hat):
        n = x.shape[0]
        x_p = jnp.zeros((n, d_in), jnp.bfloat16).at[:, :in_dim].set(
            x.astype(jnp.bfloat16))
        a_bf16 = a_hat.astype(jnp.bfloat16)

        flops = (2 * n * d_in * d_h                       # layer-0 transform
                 + 2 * n * n * d_h * n_layers             # aggregations
                 + 2 * n * d_h * d_h * (n_layers - 1)     # later transforms
                 + 2 * n * d_h * d_out)                   # final Linear
        bytes_accessed = (a_bf16.size * 2 + x_p.size * 2 + w0_p.size * 2
                          + wr_p.size * 2 + wl_p.size * 2
                          + b_p.size * 4 + bl_p.size * 4 + n * d_out * 4)

        out_p = pl.pallas_call(
            kernel,
            out_shape=jax.ShapeDtypeStruct((n, d_out), jnp.float32),
            grid=(),
            in_specs=[
                _full_spec(a_bf16.shape),
                _full_spec(x_p.shape),
                _full_spec(w0_p.shape),
                _full_spec(wr_p.shape),
                _full_spec(b_p.shape),
                _full_spec(wl_p.shape),
                _full_spec(bl_p.shape),
            ],
            out_specs=_full_spec((n, d_out)),
            compiler_params=pltpu.CompilerParams(vmem_limit_bytes=vmem_limit),
            cost_estimate=pl.CostEstimate(flops=flops, transcendentals=0,
                                          bytes_accessed=bytes_accessed),
        )(a_bf16, x_p, w0_p, wr_p, b_p, wl_p, bl_p)

        return out_p[:, :out_dim]

    return forward


# ------------------------------- glue (JAX) ----------------------------------

def gcn_normalized_adjacency(edge_index, num_nodes):
    """Dense Ahat = D^-1/2 (A + I) D^-1/2, matching PyG gcn_norm defaults.

    edge_index: [2, E] with row 0 = source, row 1 = target (flow source->target).
    """
    src, dst = edge_index[0], edge_index[1]
    self_loops = jnp.arange(num_nodes, dtype=edge_index.dtype)
    src = jnp.concatenate([src, self_loops])
    dst = jnp.concatenate([dst, self_loops])

    adj = jnp.zeros((num_nodes, num_nodes), dtype=jnp.float32)
    adj = adj.at[dst, src].add(1.0)                      # A[target, source]

    deg = jnp.zeros((num_nodes,), dtype=jnp.float32).at[dst].add(1.0)
    deg_inv_sqrt = jnp.where(deg > 0, 1.0 / jnp.sqrt(deg), 0.0)
    return deg_inv_sqrt[:, None] * adj * deg_inv_sqrt[None, :]


def glorot(key, shape):
    fan_in, fan_out = shape
    limit = jnp.sqrt(6.0 / (fan_in + fan_out))
    return jax.random.uniform(key, shape, jnp.float32, -limit, limit)


def init_gnn_params(key, in_dim, hidden_dim, n_layers):
    params = {"gcn": [], "lin": None}
    dims = [in_dim] + [hidden_dim] * n_layers
    keys = jax.random.split(key, n_layers + 1)
    for i in range(n_layers):
        w = glorot(keys[i], (dims[i], dims[i + 1]))
        b = jnp.zeros((1, dims[i + 1]), jnp.float32)
        params["gcn"].append((w, b))
    wl = glorot(keys[-1], (hidden_dim, 1))
    bl = jnp.zeros((1, 1), jnp.float32)
    params["lin"] = (wl, bl)
    return params


def gnn_forward_ref(params, x, a_hat, *, bf16=False):
    """Pure-JAX reference; bf16=True mirrors the kernel's bf16-input matmuls."""
    def mm(a, b):
        if bf16:
            return jnp.dot(a.astype(jnp.bfloat16), b.astype(jnp.bfloat16),
                           preferred_element_type=jnp.float32)
        return jnp.dot(a, b)

    h = x
    for (w, b) in params["gcn"]:
        h = jnp.maximum(mm(a_hat, mm(h, w)) + b, 0.0)
    wl, bl = params["lin"]
    return mm(h, wl) + bl


# --------------------------------- main ---------------------------------------

if __name__ == "__main__":
    key = jax.random.PRNGKey(0)
    k_x, k_e, k_p = jax.random.split(key, 3)

    # Small synthetic graph: N nodes, in_dim features, hidden_dim, 2 GCN layers.
    N, IN_DIM, HIDDEN_DIM, N_LAYERS = 16, 8, 32, 2
    NUM_EDGES = 40

    x = jax.random.normal(k_x, (N, IN_DIM), jnp.float32)
    edge_index = jax.random.randint(k_e, (2, NUM_EDGES), 0, N, jnp.int32)

    a_hat = gcn_normalized_adjacency(edge_index, N)
    params = init_gnn_params(k_p, IN_DIM, HIDDEN_DIM, N_LAYERS)

    padded = pad_gnn_params(params)        # pad/stack once, outside the call path
    forward = make_gnn_forward(padded)     # jitted wrapper around one pallas_call

    out = jax.block_until_ready(forward(x, a_hat))

    ref_bf16 = gnn_forward_ref(params, x, a_hat, bf16=True)   # matches kernel precision
    ref_f32 = gnn_forward_ref(params, x, a_hat, bf16=False)   # full-precision sanity

    assert out.shape == (N, 1)
    assert jnp.allclose(out, ref_bf16, atol=2e-3, rtol=2e-3)
    assert jnp.allclose(out, ref_f32, atol=1e-1, rtol=1e-1)

    print("KERNEL_OK")
</pallas_src>

<mosaic_0001>
module attributes {stable_mosaic.version = 11 : i64} {
  func.func @fused_gnn_kernel(%arg0: memref<16x16xbf16, #tpu.memory_space<vmem>>, %arg1: memref<16x128xbf16, #tpu.memory_space<vmem>>, %arg2: memref<128x128xbf16, #tpu.memory_space<vmem>>, %arg3: memref<1x128x128xbf16, #tpu.memory_space<vmem>>, %arg4: memref<2x1x128xf32, #tpu.memory_space<vmem>>, %arg5: memref<128x128xbf16, #tpu.memory_space<vmem>>, %arg6: memref<1x128xf32, #tpu.memory_space<vmem>>, %arg7: memref<16x128xf32, #tpu.memory_space<vmem>>) attributes {dimension_semantics = [], scalar_prefetch = 0 : i64, scratch_operands = 0 : i64, tpu.core_type = #tpu.core_type<tc>} {
    %c0 = arith.constant 0 : index
    %c0_0 = arith.constant 0 : index
    %0 = vector.load %arg1[%c0, %c0_0] : memref<16x128xbf16, #tpu.memory_space<vmem>>, vector<16x128xbf16>
    %c0_1 = arith.constant 0 : index
    %c0_2 = arith.constant 0 : index
    %1 = vector.load %arg2[%c0_1, %c0_2] : memref<128x128xbf16, #tpu.memory_space<vmem>>, vector<128x128xbf16>
    %cst = arith.constant dense<0.000000e+00> : vector<16x128xf32>
    %2 = tpu.matmul %0, %1, %cst {dimension_numbers = #tpu.dot_dimension_numbers<[1], [0], [0], [1], [0, 0, 1, 1], [], []>} : vector<16x128xbf16>, vector<128x128xbf16>, vector<16x128xf32> -> vector<16x128xf32>
    %c0_3 = arith.constant 0 : index
    %c0_4 = arith.constant 0 : index
    %3 = vector.load %arg0[%c0_3, %c0_4] : memref<16x16xbf16, #tpu.memory_space<vmem>>, vector<16x16xbf16>
    %4 = arith.truncf %2 : vector<16x128xf32> to vector<16x128xbf16>
    %cst_5 = arith.constant dense<0.000000e+00> : vector<16x128xf32>
    %5 = tpu.matmul %3, %4, %cst_5 {dimension_numbers = #tpu.dot_dimension_numbers<[1], [0], [0], [1], [0, 0, 1, 1], [], []>} : vector<16x16xbf16>, vector<16x128xbf16>, vector<16x128xf32> -> vector<16x128xf32>
    %c0_6 = arith.constant 0 : index
    %c0_7 = arith.constant 0 : index
    %c0_8 = arith.constant 0 : index
    %6 = vector.load %arg4[%c0_6, %c0_7, %c0_8] : memref<2x1x128xf32, #tpu.memory_space<vmem>>, vector<1x1x128xf32>
    %7 = vector.shape_cast %6 : vector<1x1x128xf32> to vector<1x128xf32>
    %8 = vector.broadcast %7 : vector<1x128xf32> to vector<16x128xf32>
    %9 = arith.addf %5, %8 : vector<16x128xf32>
    %cst_9 = arith.constant 0.000000e+00 : f32
    %10 = vector.broadcast %cst_9 : f32 to vector<16x128xf32>
    %11 = arith.maximumf %9, %10 : vector<16x128xf32>
    %12 = arith.truncf %11 : vector<16x128xf32> to vector<16x128xbf16>
    %c0_10 = arith.constant 0 : index
    %c0_11 = arith.constant 0 : index
    %c0_12 = arith.constant 0 : index
    %13 = vector.load %arg3[%c0_10, %c0_11, %c0_12] : memref<1x128x128xbf16, #tpu.memory_space<vmem>>, vector<1x128x128xbf16>
    %14 = vector.shape_cast %13 : vector<1x128x128xbf16> to vector<128x128xbf16>
    %cst_13 = arith.constant dense<0.000000e+00> : vector<16x128xf32>
    %15 = tpu.matmul %12, %14, %cst_13 {dimension_numbers = #tpu.dot_dimension_numbers<[1], [0], [0], [1], [0, 0, 1, 1], [], []>} : vector<16x128xbf16>, vector<128x128xbf16>, vector<16x128xf32> -> vector<16x128xf32>
    %c0_14 = arith.constant 0 : index
    %c0_15 = arith.constant 0 : index
    %16 = vector.load %arg0[%c0_14, %c0_15] : memref<16x16xbf16, #tpu.memory_space<vmem>>, vector<16x16xbf16>
    %17 = arith.truncf %15 : vector<16x128xf32> to vector<16x128xbf16>
    %cst_16 = arith.constant dense<0.000000e+00> : vector<16x128xf32>
    %18 = tpu.matmul %16, %17, %cst_16 {dimension_numbers = #tpu.dot_dimension_numbers<[1], [0], [0], [1], [0, 0, 1, 1], [], []>} : vector<16x16xbf16>, vector<16x128xbf16>, vector<16x128xf32> -> vector<16x128xf32>
    %c1 = arith.constant 1 : index
    %c0_17 = arith.constant 0 : index
    %c0_18 = arith.constant 0 : index
    %19 = vector.load %arg4[%c1, %c0_17, %c0_18] : memref<2x1x128xf32, #tpu.memory_space<vmem>>, vector<1x1x128xf32>
    %20 = vector.shape_cast %19 : vector<1x1x128xf32> to vector<1x128xf32>
    %21 = vector.broadcast %20 : vector<1x128xf32> to vector<16x128xf32>
    %22 = arith.addf %18, %21 : vector<16x128xf32>
    %cst_19 = arith.constant 0.000000e+00 : f32
    %23 = vector.broadcast %cst_19 : f32 to vector<16x128xf32>
    %24 = arith.maximumf %22, %23 : vector<16x128xf32>
    %25 = arith.truncf %24 : vector<16x128xf32> to vector<16x128xbf16>
    %c0_20 = arith.constant 0 : index
    %c0_21 = arith.constant 0 : index
    %26 = vector.load %arg5[%c0_20, %c0_21] : memref<128x128xbf16, #tpu.memory_space<vmem>>, vector<128x128xbf16>
    %cst_22 = arith.constant dense<0.000000e+00> : vector<16x128xf32>
    %27 = tpu.matmul %25, %26, %cst_22 {dimension_numbers = #tpu.dot_dimension_numbers<[1], [0], [0], [1], [0, 0, 1, 1], [], []>} : vector<16x128xbf16>, vector<128x128xbf16>, vector<16x128xf32> -> vector<16x128xf32>
    %c0_23 = arith.constant 0 : index
    %c0_24 = arith.constant 0 : index
    %28 = vector.load %arg6[%c0_23, %c0_24] : memref<1x128xf32, #tpu.memory_space<vmem>>, vector<1x128xf32>
    %29 = vector.broadcast %28 : vector<1x128xf32> to vector<16x128xf32>
    %30 = arith.addf %27, %29 : vector<16x128xf32>
    %c0_25 = arith.constant 0 : index
    %c0_26 = arith.constant 0 : index
    %31 = vector.load %arg7[%c0_25, %c0_26] : memref<16x128xf32, #tpu.memory_space<vmem>>, vector<16x128xf32>
    tpu.vector_store %arg7[%c0_25, %c0_26], %30 {strides = array<i32>} : memref<16x128xf32, #tpu.memory_space<vmem>>, vector<16x128xf32>,
    return
  }
}

</mosaic_0001>

<llo_original>
// kernel: forward.1
$region0: #{forward.1}
  #allocation0 [shape = 'u32[]', space=smem, size = 0x4, offset = 0x4, fixed_abs, tag = 'smem constant byte address 0x4 - core index']
  #allocation1 [shape = 'u32[144,128]{1,0:T(1,128)}', space=vmem, size = 0x12000, scoped, tag = 'internal scratch']
  %s0 = inlined_call_operand.vmem [shape: bf16[16,16], index: 0, kind: input, shape index: {}]
  %s1 = inlined_call_operand.vmem [shape: bf16[16,128], index: 1, kind: input, shape index: {}]
  %s2 = inlined_call_operand.hbm [shape: bf16[128,128], index: 2, kind: input, shape index: {}]
  %s3 = inlined_call_operand.hbm [shape: bf16[1,128,128], index: 3, kind: input, shape index: {}]
  %s4 = inlined_call_operand.vmem [shape: f32[2,1,128], index: 4, kind: input, shape index: {}]
  %s5 = inlined_call_operand.vmem [shape: bf16[128,128], index: 5, kind: input, shape index: {}]
  %s6 = inlined_call_operand.vmem [shape: f32[1,128], index: 6, kind: input, shape index: {}]
  %s7 = inlined_call_operand.vmem [shape: f32[16,128], index: 7, kind: output, shape index: {}]
  %s8 = sld [smem:[#allocation0]]
  $region46: #{forward.1} parent=0
    _
  %s10 = ssub.s32 1, %s8
  %s11 = scalar_select 0, %s10, %s8
  $region1: #{forward.1} parent=0
    #allocation2 [shape = 'u8[32768]{0}', space=vmem, size = 0x8000, scoped, tag = 'input window, operand 2, single buffered']
    #allocation3 [shape = 's32[1]{0}', space=sflag, size = 0x4, scoped, tag = 'scoped memory for forward.1']
    #allocation4 [shape = 'u8[32768]{0}', space=vmem, size = 0x8000, scoped, tag = 'input window, operand 3, single buffered']
    #allocation5 [shape = 's32[1]{0}', space=sflag, size = 0x4, scoped, tag = 'scoped memory for forward.1']
    %12 = vsyncpa [#allocation3], 0
    %13 = vsyncpa [#allocation5], 0
    // Predicated region
    $region2: #{forward.1} parent=1 // pred_check
      _
    $region3: #{forward.1} parent=1 // pred_check_branch
      %15 = sbr.rel (0) target = $region5
    $region4: #{forward.1} parent=1 // pred_region
      _
    $region5: #{forward.1} parent=1 // pred_fallthru
      _
    // Predicated region
    $region6: #{forward.1} parent=1 // pred_check
      _
    $region7: #{forward.1} parent=1 // pred_check_branch
      %17 = sbr.rel (0) target = $region9
    $region8: #{forward.1} parent=1 // pred_region
      _
    $region9: #{forward.1} parent=1 // pred_fallthru
      _
    // Predicated region
    $region10: #{forward.1} parent=1 // pred_check
      _
    $region11: #{forward.1} parent=1 // pred_check_branch
      %19 = sbr.rel (0) target = $region13
    $region12: #{forward.1} parent=1 // pred_region
      %s21 = ssub.s32 1024, 1024
      %22 = vsyncadd [#allocation3], %s21
      %s23 = sshll.u32 [#allocation2], 4
      %s24 = int_to_ptr.vmem [resolvable:$true] %s23
      %29 = dma.hbm_to_vmem [thread:$0]  %s2, 1024, %s24, [#allocation3], 64, 64, 4
    $region13: #{forward.1} parent=1 // pred_fallthru
      _
    // Predicated region
    $region14: #{forward.1} parent=1 // pred_check
      _
    $region15: #{forward.1} parent=1 // pred_check_branch
      %31 = sbr.rel (0) target = $region17
    $region16: #{forward.1} parent=1 // pred_region
      %s33 = ssub.s32 1024, 1024
      %34 = vsyncadd [#allocation5], %s33
      %s35 = sshll.u32 [#allocation4], 4
      %s36 = int_to_ptr.vmem [resolvable:$true] %s35
      %41 = dma.hbm_to_vmem [thread:$0]  %s3, 1024, %s36, [#allocation5], 64, 64, 4
    $region17: #{forward.1} parent=1 // pred_fallthru
      _
    // Predicated region
    $region18: #{forward.1} parent=1 // pred_check
      _
    $region19: #{forward.1} parent=1 // pred_check_branch
      %43 = sbr.rel (0) target = $region21
    $region20: #{forward.1} parent=1 // pred_region
      _
    $region21: #{forward.1} parent=1 // pred_fallthru
      _
    // Predicated region
    $region22: #{forward.1} parent=1 // pred_check
      _
    $region23: #{forward.1} parent=1 // pred_check_branch
      %45 = sbr.rel (0) target = $region25
    $region24: #{forward.1} parent=1 // pred_region
      _
    $region25: #{forward.1} parent=1 // pred_fallthru
      _
    // Predicated region
    $region26: #{forward.1} parent=1 // pred_check
      _
    $region27: #{forward.1} parent=1 // pred_check_branch
      %47 = sbr.rel (0) target = $region29
    $region28: #{forward.1} parent=1 // pred_region
      _
    $region29: #{forward.1} parent=1 // pred_fallthru
      _
    // Predicated region
    $region30: #{forward.1} parent=1 // pred_check
      _
    $region31: #{forward.1} parent=1 // pred_check_branch
      %49 = sbr.rel (0) target = $region33
    $region32: #{forward.1} parent=1 // pred_region
      %50 = dma.done [#allocation3], 1024
    $region33: #{forward.1} parent=1 // pred_fallthru
      _
    // Predicated region
    $region34: #{forward.1} parent=1 // pred_check
      _
    $region35: #{forward.1} parent=1 // pred_check_branch
      %52 = sbr.rel (0) target = $region37
    $region36: #{forward.1} parent=1 // pred_region
      %53 = dma.done [#allocation5], 1024
    $region37: #{forward.1} parent=1 // pred_fallthru
      _
    %v55 = vld [vmem:[%s1] sm:$0xf]
    %v56 = vld [vmem:[%s1 + $0x4] sm:$0xf]
    %v57 = vld [vmem:[#allocation2] sm:$0xf]
    %v58 = vld [vmem:[#allocation2 + $0x4] sm:$0xf]
    %v59 = vld [vmem:[#allocation2 + $0x8] sm:$0xf]
    %v60 = vld [vmem:[#allocation2 + $0xc] sm:$0xf]
    %v61 = vld [vmem:[#allocation2 + $0x10] sm:$0xf]
    %v62 = vld [vmem:[#allocation2 + $0x14] sm:$0xf]
    %v63 = vld [vmem:[#allocation2 + $0x18] sm:$0xf]
    %v64 = vld [vmem:[#allocation2 + $0x1c] sm:$0xf]
    %v65 = vld [vmem:[#allocation2 + $0x20] sm:$0xf]
    %v66 = vld [vmem:[#allocation2 + $0x24] sm:$0xf]
    %v67 = vld [vmem:[#allocation2 + $0x28] sm:$0xf]
    %v68 = vld [vmem:[#allocation2 + $0x2c] sm:$0xf]
    %v69 = vld [vmem:[#allocation2 + $0x30] sm:$0xf]
    %v70 = vld [vmem:[#allocation2 + $0x34] sm:$0xf]
    %v71 = vld [vmem:[#allocation2 + $0x38] sm:$0xf]
    %v72 = vld [vmem:[#allocation2 + $0x3c] sm:$0xf]
    %v75 = vunpack.c.l.b16 %v55
    %v76 = vunpack.c.l.b16 %v56
    %v77 = vpack.c.b16 %v76, %v75
    %v95 = vunpack.c.l.b16 %v57
    %v96 = vunpack.c.l.b16 %v58
    %v97 = vunpack.c.l.b16 %v59
    %v98 = vunpack.c.l.b16 %v60
    %v99 = vunpack.c.l.b16 %v61
    %v100 = vunpack.c.l.b16 %v62
    %v101 = vunpack.c.l.b16 %v63
    %v102 = vunpack.c.l.b16 %v64
    %v103 = vunpack.c.l.b16 %v65
    %v104 = vunpack.c.l.b16 %v66
    %v105 = vunpack.c.l.b16 %v67
    %v106 = vunpack.c.l.b16 %v68
    %v107 = vunpack.c.l.b16 %v69
    %v108 = vunpack.c.l.b16 %v70
    %v109 = vunpack.c.l.b16 %v71
    %v110 = vunpack.c.l.b16 %v72
    %v111 = vpack.c.b16 %v96, %v95
    %v112 = vpack.c.b16 %v98, %v97
    %v113 = vpack.c.b16 %v100, %v99
    %v114 = vpack.c.b16 %v102, %v101
    %v115 = vpack.c.b16 %v104, %v103
    %v116 = vpack.c.b16 %v106, %v105
    %v117 = vpack.c.b16 %v108, %v107
    %v118 = vpack.c.b16 %v110, %v109
    %127 = vmatprep.subr.bf16.mxu0 0
    %128 = vmatpush1.bf16.msra.mxu0 %v111
    %129 = vmatprep.subr.bf16.mxu0 0
    %130 = vmatpush1.bf16.msra.mxu0 %v112
    %131 = vmatprep.subr.bf16.mxu0 0
    %132 = vmatpush1.bf16.msra.mxu0 %v113
    %133 = vmatprep.subr.bf16.mxu0 0
    %134 = vmatpush1.bf16.msra.mxu0 %v114
    %135 = vmatprep.subr.bf16.mxu0 0
    %136 = vmatpush1.bf16.msra.mxu0 %v115
    %137 = vmatprep.subr.bf16.mxu0 0
    %138 = vmatpush1.bf16.msra.mxu0 %v116
    %139 = vmatprep.subr.bf16.mxu0 0
    %140 = vmatpush1.bf16.msra.mxu0 %v117
    %141 = vmatprep.subr.bf16.mxu0 0
    %142 = vmatpush1.bf16.msra.mxu0 %v118
    %143 = vmatprep.subr.bf16.mxu0 0
    %144 = vmatpush1.bf16.msra.mxu0 0
    %145 = vmatprep.subr.bf16.mxu0 0
    %146 = vmatpush1.bf16.msra.mxu0 0
    %147 = vmatprep.subr.bf16.mxu0 0
    %148 = vmatpush1.bf16.msra.mxu0 0
    %149 = vmatprep.subr.bf16.mxu0 0
    %150 = vmatpush1.bf16.msra.mxu0 0
    %151 = vmatprep.subr.bf16.mxu0 0
    %152 = vmatpush1.bf16.msra.mxu0 0
    %153 = vmatprep.subr.bf16.mxu0 0
    %154 = vmatpush1.bf16.msra.mxu0 0
    %155 = vmatprep.subr.bf16.mxu0 0
    %156 = vmatpush1.bf16.msra.mxu0 0
    %157 = vmatprep.subr.bf16.mxu0 0
    %158 = vmatpush1.bf16.msra.mxu0 0
    %159 = vmatprep.mubr.bf16.mxu0 0
    %160 = vmatmul.mubr.bf16.gmra.mrb[0].mxu0 %v77
    %v161 = vpop.f32.mrb[0].mxu0
    %v162 = vadd.f32 0.0, %v161
    %v163 = vpop.f32.mrb[0].mxu0
    %v164 = vpop.f32.mrb[0].mxu0
    %v165 = vadd.f32 0.0, %v164
    %v166 = vpop.f32.mrb[0].mxu0
    %167 = vdwg.mxu0
    %v168 = vld [vmem:[%s0] sm:$0xf]
    %v169 = vld [vmem:[%s0 + $0x4] sm:$0xf]
    %v170 = vpack.c.bf16 %v165, %v162
    %v171 = vld [vmem:[%s4] sm:$0x1]
    %v173 = vlaneseq
    %v174 = vshrl.u32 %v173, 7
    %v175 = vsub.s32 0, %v174
    %v176 = vrot.slane %v171, %v175
    %v180 = vunpack.c.l.b16 %v168
    %v181 = vunpack.c.l.b16 %v169
    %v182 = vpack.c.b16 %v181, %v180
    %vm183 = vcmask 130048
    %v185 = vsel %vm183, %v182, 0
    %187 = vmatprep.subr.bf16.mxu0 0
    %188 = vmatpush1.bf16.msra.mxu0 %v170
    %189 = vmatprep.subr.bf16.mxu0 0
    %190 = vmatpush1.bf16.msra.mxu0 0
    %191 = vmatprep.subr.bf16.mxu0 0
    %192 = vmatpush1.bf16.msra.mxu0 0
    %193 = vmatprep.subr.bf16.mxu0 0
    %194 = vmatpush1.bf16.msra.mxu0 0
    %195 = vmatprep.subr.bf16.mxu0 0
    %196 = vmatpush1.bf16.msra.mxu0 0
    %197 = vmatprep.subr.bf16.mxu0 0
    %198 = vmatpush1.bf16.msra.mxu0 0
    %199 = vmatprep.subr.bf16.mxu0 0
    %200 = vmatpush1.bf16.msra.mxu0 0
    %201 = vmatprep.subr.bf16.mxu0 0
    %202 = vmatpush1.bf16.msra.mxu0 0
    %203 = vmatprep.subr.bf16.mxu0 0
    %204 = vmatpush1.bf16.msra.mxu0 0
    %205 = vmatprep.subr.bf16.mxu0 0
    %206 = vmatpush1.bf16.msra.mxu0 0
    %207 = vmatprep.subr.bf16.mxu0 0
    %208 = vmatpush1.bf16.msra.mxu0 0
    %209 = vmatprep.subr.bf16.mxu0 0
    %210 = vmatpush1.bf16.msra.mxu0 0
    %211 = vmatprep.subr.bf16.mxu0 0
    %212 = vmatpush1.bf16.msra.mxu0 0
    %213 = vmatprep.subr.bf16.mxu0 0
    %214 = vmatpush1.bf16.msra.mxu0 0
    %215 = vmatprep.subr.bf16.mxu0 0
    %216 = vmatpush1.bf16.msra.mxu0 0
    %217 = vmatprep.subr.bf16.mxu0 0
    %218 = vmatpush1.bf16.msra.mxu0 0
    %219 = vmatprep.mubr.bf16.mxu0 0
    %220 = vmatmul.mubr.bf16.gmra.mrb[0].mxu0 %v185
    %v221 = vpop.f32.mrb[0].mxu0
    %v222 = vadd.f32 %v176, %v221
    %v223 = vpop.f32.mrb[0].mxu0
    %v224 = vpop.f32.mrb[0].mxu0
    %v225 = vadd.f32 %v176, %v224
    %v226 = vpop.f32.mrb[0].mxu0
    %227 = vdwg.mxu0
    %v228 = vmax.f32 %v222, 0.0
    %v229 = vmax.f32 %v225, 0.0
    %v230 = vpack.c.bf16 %v229, %v228
    %v231 = vld [vmem:[#allocation4] sm:$0xf]
    %v232 = vld [vmem:[#allocation4 + $0x4] sm:$0xf]
    %v233 = vld [vmem:[#allocation4 + $0x8] sm:$0xf]
    %v234 = vld [vmem:[#allocation4 + $0xc] sm:$0xf]
    %v235 = vld [vmem:[#allocation4 + $0x10] sm:$0xf]
    %v236 = vld [vmem:[#allocation4 + $0x14] sm:$0xf]
    %v237 = vld [vmem:[#allocation4 + $0x18] sm:$0xf]
    %v238 = vld [vmem:[#allocation4 + $0x1c] sm:$0xf]
    %v239 = vld [vmem:[#allocation4 + $0x20] sm:$0xf]
    %v240 = vld [vmem:[#allocation4 + $0x24] sm:$0xf]
    %v241 = vld [vmem:[#allocation4 + $0x28] sm:$0xf]
    %v242 = vld [vmem:[#allocation4 + $0x2c] sm:$0xf]
    %v243 = vld [vmem:[#allocation4 + $0x30] sm:$0xf]
    %v244 = vld [vmem:[#allocation4 + $0x34] sm:$0xf]
    %v245 = vld [vmem:[#allocation4 + $0x38] sm:$0xf]
    %v246 = vld [vmem:[#allocation4 + $0x3c] sm:$0xf]
    %v263 = vunpack.c.l.b16 %v231
    %v264 = vunpack.c.l.b16 %v232
    %v265 = vunpack.c.l.b16 %v233
    %v266 = vunpack.c.l.b16 %v234
    %v267 = vunpack.c.l.b16 %v235
    %v268 = vunpack.c.l.b16 %v236
    %v269 = vunpack.c.l.b16 %v237
    %v270 = vunpack.c.l.b16 %v238
    %v271 = vunpack.c.l.b16 %v239
    %v272 = vunpack.c.l.b16 %v240
    %v273 = vunpack.c.l.b16 %v241
    %v274 = vunpack.c.l.b16 %v242
    %v275 = vunpack.c.l.b16 %v243
    %v276 = vunpack.c.l.b16 %v244
    %v277 = vunpack.c.l.b16 %v245
    %v278 = vunpack.c.l.b16 %v246
    %v279 = vpack.c.b16 %v264, %v263
    %v280 = vpack.c.b16 %v266, %v265
    %v281 = vpack.c.b16 %v268, %v267
    %v282 = vpack.c.b16 %v270, %v269
    %v283 = vpack.c.b16 %v272, %v271
    %v284 = vpack.c.b16 %v274, %v273
    %v285 = vpack.c.b16 %v276, %v275
    %v286 = vpack.c.b16 %v278, %v277
    %295 = vmatprep.subr.bf16.mxu0 0
    %296 = vmatpush1.bf16.msra.mxu0 %v279
    %297 = vmatprep.subr.bf16.mxu0 0
    %298 = vmatpush1.bf16.msra.mxu0 %v280
    %299 = vmatprep.subr.bf16.mxu0 0
    %300 = vmatpush1.bf16.msra.mxu0 %v281
    %301 = vmatprep.subr.bf16.mxu0 0
    %302 = vmatpush1.bf16.msra.mxu0 %v282
    %303 = vmatprep.subr.bf16.mxu0 0
    %304 = vmatpush1.bf16.msra.mxu0 %v283
    %305 = vmatprep.subr.bf16.mxu0 0
    %306 = vmatpush1.bf16.msra.mxu0 %v284
    %307 = vmatprep.subr.bf16.mxu0 0
    %308 = vmatpush1.bf16.msra.mxu0 %v285
    %309 = vmatprep.subr.bf16.mxu0 0
    %310 = vmatpush1.bf16.msra.mxu0 %v286
    %311 = vmatprep.subr.bf16.mxu0 0
    %312 = vmatpush1.bf16.msra.mxu0 0
    %313 = vmatprep.subr.bf16.mxu0 0
    %314 = vmatpush1.bf16.msra.mxu0 0
    %315 = vmatprep.subr.bf16.mxu0 0
    %316 = vmatpush1.bf16.msra.mxu0 0
    %317 = vmatprep.subr.bf16.mxu0 0
    %318 = vmatpush1.bf16.msra.mxu0 0
    %319 = vmatprep.subr.bf16.mxu0 0
    %320 = vmatpush1.bf16.msra.mxu0 0
    %321 = vmatprep.subr.bf16.mxu0 0
    %322 = vmatpush1.bf16.msra.mxu0 0
    %323 = vmatprep.subr.bf16.mxu0 0
    %324 = vmatpush1.bf16.msra.mxu0 0
    %325 = vmatprep.subr.bf16.mxu0 0
    %326 = vmatpush1.bf16.msra.mxu0 0
    %327 = vmatprep.mubr.bf16.mxu0 0
    %328 = vmatmul.mubr.bf16.gmra.mrb[0].mxu0 %v230
    %v329 = vpop.f32.mrb[0].mxu0
    %v330 = vadd.f32 0.0, %v329
    %v331 = vpop.f32.mrb[0].mxu0
    %v332 = vpop.f32.mrb[0].mxu0
    %v333 = vadd.f32 0.0, %v332
    %v334 = vpop.f32.mrb[0].mxu0
    %335 = vdwg.mxu0
    %v336 = vpack.c.bf16 %v333, %v330
    %s337 = scalar_lea.vmem %s4, 1
    %v338 = vld [vmem:[%s337] sm:$0x1]
    %v340 = vlaneseq
    %v341 = vshrl.u32 %v340, 7
    %v342 = vsub.s32 0, %v341
    %v343 = vrot.slane %v338, %v342
    %345 = vmatprep.subr.bf16.mxu0 0
    %346 = vmatpush1.bf16.msra.mxu0 %v336
    %347 = vmatprep.subr.bf16.mxu0 0
    %348 = vmatpush1.bf16.msra.mxu0 0
    %349 = vmatprep.subr.bf16.mxu0 0
    %350 = vmatpush1.bf16.msra.mxu0 0
    %351 = vmatprep.subr.bf16.mxu0 0
    %352 = vmatpush1.bf16.msra.mxu0 0
    %353 = vmatprep.subr.bf16.mxu0 0
    %354 = vmatpush1.bf16.msra.mxu0 0
    %355 = vmatprep.subr.bf16.mxu0 0
    %356 = vmatpush1.bf16.msra.mxu0 0
    %357 = vmatprep.subr.bf16.mxu0 0
    %358 = vmatpush1.bf16.msra.mxu0 0
    %359 = vmatprep.subr.bf16.mxu0 0
    %360 = vmatpush1.bf16.msra.mxu0 0
    %361 = vmatprep.subr.bf16.mxu0 0
    %362 = vmatpush1.bf16.msra.mxu0 0
    %363 = vmatprep.subr.bf16.mxu0 0
    %364 = vmatpush1.bf16.msra.mxu0 0
    %365 = vmatprep.subr.bf16.mxu0 0
    %366 = vmatpush1.bf16.msra.mxu0 0
    %367 = vmatprep.subr.bf16.mxu0 0
    %368 = vmatpush1.bf16.msra.mxu0 0
    %369 = vmatprep.subr.bf16.mxu0 0
    %370 = vmatpush1.bf16.msra.mxu0 0
    %371 = vmatprep.subr.bf16.mxu0 0
    %372 = vmatpush1.bf16.msra.mxu0 0
    %373 = vmatprep.subr.bf16.mxu0 0
    %374 = vmatpush1.bf16.msra.mxu0 0
    %375 = vmatprep.subr.bf16.mxu0 0
    %376 = vmatpush1.bf16.msra.mxu0 0
    %377 = vmatprep.mubr.bf16.mxu0 0
    %378 = vmatmul.mubr.bf16.gmra.mrb[0].mxu0 %v185
    %v379 = vpop.f32.mrb[0].mxu0
    %v380 = vadd.f32 %v343, %v379
    %v381 = vpop.f32.mrb[0].mxu0
    %v382 = vpop.f32.mrb[0].mxu0
    %v383 = vadd.f32 %v343, %v382
    %v384 = vpop.f32.mrb[0].mxu0
    %385 = vdwg.mxu0
    %v386 = vmax.f32 %v380, 0.0
    %v387 = vmax.f32 %v383, 0.0
    %v388 = vpack.c.bf16 %v387, %v386
    %v389 = vld [vmem:[%s5] sm:$0xf]
    %v390 = vld [vmem:[%s5 + $0x4] sm:$0xf]
    %v391 = vld [vmem:[%s5 + $0x8] sm:$0xf]
    %v392 = vld [vmem:[%s5 + $0xc] sm:$0xf]
    %v393 = vld [vmem:[%s5 + $0x10] sm:$0xf]
    %v394 = vld [vmem:[%s5 + $0x14] sm:$0xf]
    %v395 = vld [vmem:[%s5 + $0x18] sm:$0xf]
    %v396 = vld [vmem:[%s5 + $0x1c] sm:$0xf]
    %v397 = vld [vmem:[%s5 + $0x20] sm:$0xf]
    %v398 = vld [vmem:[%s5 + $0x24] sm:$0xf]
    %v399 = vld [vmem:[%s5 + $0x28] sm:$0xf]
    %v400 = vld [vmem:[%s5 + $0x2c] sm:$0xf]
    %v401 = vld [vmem:[%s5 + $0x30] sm:$0xf]
    %v402 = vld [vmem:[%s5 + $0x34] sm:$0xf]
    %v403 = vld [vmem:[%s5 + $0x38] sm:$0xf]
    %v404 = vld [vmem:[%s5 + $0x3c] sm:$0xf]
    %v405 = vld [vmem:[%s6] sm:$0x1]
    %v407 = vlaneseq
    %v408 = vshrl.u32 %v407, 7
    %v409 = vsub.s32 0, %v408
    %v410 = vrot.slane %v405, %v409
    %v428 = vunpack.c.l.b16 %v389
    %v429 = vunpack.c.l.b16 %v390
    %v430 = vunpack.c.l.b16 %v391
    %v431 = vunpack.c.l.b16 %v392
    %v432 = vunpack.c.l.b16 %v393
    %v433 = vunpack.c.l.b16 %v394
    %v434 = vunpack.c.l.b16 %v395
    %v435 = vunpack.c.l.b16 %v396
    %v436 = vunpack.c.l.b16 %v397
    %v437 = vunpack.c.l.b16 %v398
    %v438 = vunpack.c.l.b16 %v399
    %v439 = vunpack.c.l.b16 %v400
    %v440 = vunpack.c.l.b16 %v401
    %v441 = vunpack.c.l.b16 %v402
    %v442 = vunpack.c.l.b16 %v403
    %v443 = vunpack.c.l.b16 %v404
    %v444 = vpack.c.b16 %v429, %v428
    %v445 = vpack.c.b16 %v431, %v430
    %v446 = vpack.c.b16 %v433, %v432
    %v447 = vpack.c.b16 %v435, %v434
    %v448 = vpack.c.b16 %v437, %v436
    %v449 = vpack.c.b16 %v439, %v438
    %v450 = vpack.c.b16 %v441, %v440
    %v451 = vpack.c.b16 %v443, %v442
    %460 = vmatprep.subr.bf16.mxu0 0
    %461 = vmatpush1.bf16.msra.mxu0 %v444
    %462 = vmatprep.subr.bf16.mxu0 0
    %463 = vmatpush1.bf16.msra.mxu0 %v445
    %464 = vmatprep.subr.bf16.mxu0 0
    %465 = vmatpush1.bf16.msra.mxu0 %v446
    %466 = vmatprep.subr.bf16.mxu0 0
    %467 = vmatpush1.bf16.msra.mxu0 %v447
    %468 = vmatprep.subr.bf16.mxu0 0
    %469 = vmatpush1.bf16.msra.mxu0 %v448
    %470 = vmatprep.subr.bf16.mxu0 0
    %471 = vmatpush1.bf16.msra.mxu0 %v449
    %472 = vmatprep.subr.bf16.mxu0 0
    %473 = vmatpush1.bf16.msra.mxu0 %v450
    %474 = vmatprep.subr.bf16.mxu0 0
    %475 = vmatpush1.bf16.msra.mxu0 %v451
    %476 = vmatprep.subr.bf16.mxu0 0
    %477 = vmatpush1.bf16.msra.mxu0 0
    %478 = vmatprep.subr.bf16.mxu0 0
    %479 = vmatpush1.bf16.msra.mxu0 0
    %480 = vmatprep.subr.bf16.mxu0 0
    %481 = vmatpush1.bf16.msra.mxu0 0
    %482 = vmatprep.subr.bf16.mxu0 0
    %483 = vmatpush1.bf16.msra.mxu0 0
    %484 = vmatprep.subr.bf16.mxu0 0
    %485 = vmatpush1.bf16.msra.mxu0 0
    %486 = vmatprep.subr.bf16.mxu0 0
    %487 = vmatpush1.bf16.msra.mxu0 0
    %488 = vmatprep.subr.bf16.mxu0 0
    %489 = vmatpush1.bf16.msra.mxu0 0
    %490 = vmatprep.subr.bf16.mxu0 0
    %491 = vmatpush1.bf16.msra.mxu0 0
    %492 = vmatprep.mubr.bf16.mxu0 0
    %493 = vmatmul.mubr.bf16.gmra.mrb[0].mxu0 %v388
    %v494 = vpop.f32.mrb[0].mxu0
    %v495 = vadd.f32 %v410, %v494
    %v496 = vpop.f32.mrb[0].mxu0
    %v497 = vpop.f32.mrb[0].mxu0
    %v498 = vadd.f32 %v410, %v497
    %v499 = vpop.f32.mrb[0].mxu0
    %500 = vdwg.mxu0
    %501 = vst [vmem:[%s7] sm:$0xff] %v495
    %502 = vst [vmem:[%s7 + $0x8] sm:$0xff] %v498
    // Predicated region
    $region38: #{forward.1} parent=1 // pred_check
      _
    $region39: #{forward.1} parent=1 // pred_check_branch
      %504 = sbr.rel (0) target = $region41
    $region40: #{forward.1} parent=1 // pred_region
      _
    $region41: #{forward.1} parent=1 // pred_fallthru
      _
    // Predicated region
    $region42: #{forward.1} parent=1 // pred_check
      _
    $region43: #{forward.1} parent=1 // pred_check_branch
      %506 = sbr.rel (0) target = $region45
    $region44: #{forward.1} parent=1 // pred_region
      _
    $region45: #{forward.1} parent=1 // pred_fallthru
      _
    %507 = vsyncpa [#allocation3], 1
    %508 = vsyncpa [#allocation5], 1

</llo_original>
